<compile_context>
chip_gen: v6e
topology: v6e:2x2x1
jax: 0.10.0
libtpu: 0.0.40
codegen_flags: <defaults>
</compile_context>

<pallas_src>
import math

import jax
import jax.numpy as jnp
from jax.experimental import pallas as pl
from jax.experimental.pallas import tpu as pltpu


# Padded (lane-aligned) layer widths; logical widths are 200 -> 100 -> 50.
_H1, _H2, _H3 = 256, 128, 128
_OUT_DIM = 50  # logical output width of the encoder


def _round_up(x, m):
    return ((x + m - 1) // m) * m


def _linear_encoder_kernel(x_ref, w1_ref, b1_ref, w2_ref, b2_ref, w3_ref, b3_ref,
                           o_ref):
    """Fused 3x(Linear + ReLU): bf16 MXU matmuls, f32 accumulate/bias/ReLU."""
    x = x_ref[...]  # bf16 (tb, d_pad)

    h1 = jnp.dot(x, w1_ref[...], preferred_element_type=jnp.float32) + b1_ref[...]
    h1 = jnp.maximum(h1, 0.0).astype(jnp.bfloat16)

    h2 = jnp.dot(h1, w2_ref[...], preferred_element_type=jnp.float32) + b2_ref[...]
    h2 = jnp.maximum(h2, 0.0).astype(jnp.bfloat16)

    h3 = jnp.dot(h2, w3_ref[...], preferred_element_type=jnp.float32) + b3_ref[...]
    o_ref[...] = jnp.maximum(h3, 0.0).astype(o_ref.dtype)


def linear_encoder_forward(x, kernel_params, *, block_batch=512):
    """Run the fused MLP kernel.

    x: (batch, D) float32.
    kernel_params: output of pack_params_for_kernel (padded bf16 weights,
                   padded f32 biases).
    Returns (batch, 50) float32.
    """
    w1, b1, w2, b2, w3, b3 = kernel_params
    batch, d = x.shape
    d_pad = w1.shape[0]
    assert d <= d_pad, (d, d_pad)

    # Rows per grid step: multiple of 16 (bf16 sublane packing), capped at
    # block_batch so 2x double-buffered x tiles stay small even on v7x VMEM.
    tb = min(block_batch, _round_up(max(batch, 1), 16))
    batch_pad = _round_up(batch, tb)

    # Pad batch rows + feature columns with zeros; cast to bf16 at the boundary.
    x_p = jnp.pad(x.astype(jnp.bfloat16),
                  ((0, batch_pad - batch), (0, d_pad - d)))

    grid = (batch_pad // tb,)

    flops = 2 * batch_pad * (d_pad * _H1 + _H1 * _H2 + _H2 * _H3)
    bytes_accessed = (
        x_p.size * 2                                      # bf16 activations in
        + (w1.size + w2.size + w3.size) * 2               # bf16 weights
        + (b1.size + b2.size + b3.size) * 4               # f32 biases
        + batch_pad * _H3 * 4                             # f32 output
    )

    out_padded = pl.pallas_call(
        _linear_encoder_kernel,
        out_shape=jax.ShapeDtypeStruct((batch_pad, _H3), jnp.float32),
        grid_spec=pltpu.PrefetchScalarGridSpec(
            num_scalar_prefetch=0,
            grid=grid,
            in_specs=[
                # Activations: tiled over batch.
                pl.BlockSpec((tb, d_pad), lambda i: (i, 0)),
                # Weights / biases: constant block index -> resident in VMEM.
                pl.BlockSpec(w1.shape, lambda i: (0, 0)),
                pl.BlockSpec(b1.shape, lambda i: (0, 0)),
                pl.BlockSpec(w2.shape, lambda i: (0, 0)),
                pl.BlockSpec(b2.shape, lambda i: (0, 0)),
                pl.BlockSpec(w3.shape, lambda i: (0, 0)),
                pl.BlockSpec(b3.shape, lambda i: (0, 0)),
            ],
            out_specs=pl.BlockSpec((tb, _H3), lambda i: (i, 0)),
        ),
        compiler_params=pltpu.CompilerParams(
            dimension_semantics=("parallel",),
            vmem_limit_bytes=32 * 1024 * 1024,
        ),
        cost_estimate=pl.CostEstimate(
            flops=flops, transcendentals=0, bytes_accessed=bytes_accessed),
    )(x_p, w1, b1, w2, b2, w3, b3)

    # Slice away batch padding and the padded output lanes (cols 50..127 are 0).
    return out_padded[:batch, :_OUT_DIM]


def init_linear_encoder_params(key, cell_id_input_dim):
    """PyTorch nn.Linear-style init (uniform +-1/sqrt(fan_in)), f32, unpadded.

    Weights returned as (in, out) so that x @ W == PyTorch's x @ W^T; biases (out,).
    """
    dims = [(cell_id_input_dim, 200), (200, 100), (100, 50)]
    params = []
    for fan_in, fan_out in dims:
        key, kw, kb = jax.random.split(key, 3)
        bound = 1.0 / math.sqrt(fan_in)
        w = jax.random.uniform(kw, (fan_in, fan_out), jnp.float32, -bound, bound)
        b = jax.random.uniform(kb, (fan_out,), jnp.float32, -bound, bound)
        params.extend([w, b])
    return tuple(params)


def pack_params_for_kernel(params, cell_id_input_dim):
    """Zero-pad to lane-aligned widths and cast weights to bf16 once, at init time."""
    w1, b1, w2, b2, w3, b3 = params
    d_pad = _round_up(cell_id_input_dim, 128)

    def pad_w(w, rows, cols):
        out = jnp.zeros((rows, cols), jnp.float32)
        out = out.at[:w.shape[0], :w.shape[1]].set(w)
        return out.astype(jnp.bfloat16)

    def pad_b(b, cols):
        out = jnp.zeros((1, cols), jnp.float32)
        return out.at[0, :b.shape[0]].set(b)

    return (pad_w(w1, d_pad, _H1), pad_b(b1, _H1),
            pad_w(w2, _H1, _H2), pad_b(b2, _H2),
            pad_w(w3, _H2, _H3), pad_b(b3, _H3))


def linear_encoder_reference(x, params):
    """Plain-JAX f32 reference (exact PyTorch semantics)."""
    w1, b1, w2, b2, w3, b3 = params
    h = jnp.maximum(x @ w1 + b1, 0.0)
    h = jnp.maximum(h @ w2 + b2, 0.0)
    h = jnp.maximum(h @ w3 + b3, 0.0)
    return h


def linear_encoder_reference_bf16(x, params):
    """Reference mirroring the kernel's bf16-input / f32-accumulate precision."""
    w1, b1, w2, b2, w3, b3 = params
    h1 = jnp.maximum(
        jnp.dot(x.astype(jnp.bfloat16), w1.astype(jnp.bfloat16),
                preferred_element_type=jnp.float32) + b1, 0.0).astype(jnp.bfloat16)
    h2 = jnp.maximum(
        jnp.dot(h1, w2.astype(jnp.bfloat16),
                preferred_element_type=jnp.float32) + b2, 0.0).astype(jnp.bfloat16)
    h3 = jnp.maximum(
        jnp.dot(h2, w3.astype(jnp.bfloat16),
                preferred_element_type=jnp.float32) + b3, 0.0)
    return h3


if __name__ == "__main__":
    key = jax.random.PRNGKey(0)

    batch = 2
    cell_id_input_dim = 32  # small synthetic gene-expression dimension

    key, kx, kp = jax.random.split(key, 3)
    x = jax.random.normal(kx, (batch, cell_id_input_dim), dtype=jnp.float32)
    params = init_linear_encoder_params(kp, cell_id_input_dim)
    kernel_params = pack_params_for_kernel(params, cell_id_input_dim)

    out = jax.block_until_ready(linear_encoder_forward(x, kernel_params))
    assert out.shape == (batch, _OUT_DIM), out.shape

    ref_bf16 = linear_encoder_reference_bf16(x, params)
    ref_f32 = linear_encoder_reference(x, params)
    assert jnp.allclose(out, ref_bf16, atol=2e-2, rtol=2e-2), \
        "mismatch vs bf16-precision reference"
    assert jnp.allclose(out, ref_f32, atol=1e-1, rtol=1e-1), \
        "mismatch vs f32 reference"

    print("KERNEL_OK")
</pallas_src>

<mosaic_0001>
module attributes {stable_mosaic.version = 11 : i64} {
  func.func @_linear_encoder_kernel(%arg0: i32, %arg1: memref<16x128xbf16, #tpu.memory_space<vmem>>, %arg2: memref<128x256xbf16, #tpu.memory_space<vmem>>, %arg3: memref<1x256xf32, #tpu.memory_space<vmem>>, %arg4: memref<256x128xbf16, #tpu.memory_space<vmem>>, %arg5: memref<1x128xf32, #tpu.memory_space<vmem>>, %arg6: memref<128x128xbf16, #tpu.memory_space<vmem>>, %arg7: memref<1x128xf32, #tpu.memory_space<vmem>>, %arg8: memref<16x128xf32, #tpu.memory_space<vmem>>) attributes {dimension_semantics = [#tpu.dimension_semantics<parallel>], iteration_bounds = array<i64: 1>, scalar_prefetch = 0 : i64, scratch_operands = 0 : i64, tpu.core_type = #tpu.core_type<tc>, window_params = [{transform_indices = @transform_0, window_bounds = array<i64: 16, 128>}, {pipeline_mode = #tpu.pipeline_mode<synchronous>, transform_indices = @transform_1, window_bounds = array<i64: 128, 256>}, {pipeline_mode = #tpu.pipeline_mode<synchronous>, transform_indices = @transform_2, window_bounds = array<i64: 1, 256>}, {pipeline_mode = #tpu.pipeline_mode<synchronous>, transform_indices = @transform_3, window_bounds = array<i64: 256, 128>}, {pipeline_mode = #tpu.pipeline_mode<synchronous>, transform_indices = @transform_4, window_bounds = array<i64: 1, 128>}, {pipeline_mode = #tpu.pipeline_mode<synchronous>, transform_indices = @transform_5, window_bounds = array<i64: 128, 128>}, {pipeline_mode = #tpu.pipeline_mode<synchronous>, transform_indices = @transform_6, window_bounds = array<i64: 1, 128>}, {transform_indices = @transform_7, window_bounds = array<i64: 16, 128>}]} {
    %c0 = arith.constant 0 : index
    %c0_0 = arith.constant 0 : index
    %0 = vector.load %arg1[%c0, %c0_0] : memref<16x128xbf16, #tpu.memory_space<vmem>>, vector<16x128xbf16>
    %c0_1 = arith.constant 0 : index
    %c0_2 = arith.constant 0 : index
    %1 = vector.load %arg2[%c0_1, %c0_2] : memref<128x256xbf16, #tpu.memory_space<vmem>>, vector<128x256xbf16>
    %cst = arith.constant dense<0.000000e+00> : vector<16x256xf32>
    %2 = tpu.matmul %0, %1, %cst {dimension_numbers = #tpu.dot_dimension_numbers<[1], [0], [0], [1], [0, 0, 1, 1], [], []>} : vector<16x128xbf16>, vector<128x256xbf16>, vector<16x256xf32> -> vector<16x256xf32>
    %c0_3 = arith.constant 0 : index
    %c0_4 = arith.constant 0 : index
    %3 = vector.load %arg3[%c0_3, %c0_4] : memref<1x256xf32, #tpu.memory_space<vmem>>, vector<1x256xf32>
    %4 = vector.broadcast %3 : vector<1x256xf32> to vector<16x256xf32>
    %5 = arith.addf %2, %4 : vector<16x256xf32>
    %cst_5 = arith.constant 0.000000e+00 : f32
    %6 = vector.broadcast %cst_5 : f32 to vector<16x256xf32>
    %7 = arith.maximumf %5, %6 : vector<16x256xf32>
    %8 = arith.truncf %7 : vector<16x256xf32> to vector<16x256xbf16>
    %c0_6 = arith.constant 0 : index
    %c0_7 = arith.constant 0 : index
    %9 = vector.load %arg4[%c0_6, %c0_7] : memref<256x128xbf16, #tpu.memory_space<vmem>>, vector<256x128xbf16>
    %cst_8 = arith.constant dense<0.000000e+00> : vector<16x128xf32>
    %10 = tpu.matmul %8, %9, %cst_8 {dimension_numbers = #tpu.dot_dimension_numbers<[1], [0], [0], [1], [0, 0, 1, 1], [], []>} : vector<16x256xbf16>, vector<256x128xbf16>, vector<16x128xf32> -> vector<16x128xf32>
    %c0_9 = arith.constant 0 : index
    %c0_10 = arith.constant 0 : index
    %11 = vector.load %arg5[%c0_9, %c0_10] : memref<1x128xf32, #tpu.memory_space<vmem>>, vector<1x128xf32>
    %12 = vector.broadcast %11 : vector<1x128xf32> to vector<16x128xf32>
    %13 = arith.addf %10, %12 : vector<16x128xf32>
    %cst_11 = arith.constant 0.000000e+00 : f32
    %14 = vector.broadcast %cst_11 : f32 to vector<16x128xf32>
    %15 = arith.maximumf %13, %14 : vector<16x128xf32>
    %16 = arith.truncf %15 : vector<16x128xf32> to vector<16x128xbf16>
    %c0_12 = arith.constant 0 : index
    %c0_13 = arith.constant 0 : index
    %17 = vector.load %arg6[%c0_12, %c0_13] : memref<128x128xbf16, #tpu.memory_space<vmem>>, vector<128x128xbf16>
    %cst_14 = arith.constant dense<0.000000e+00> : vector<16x128xf32>
    %18 = tpu.matmul %16, %17, %cst_14 {dimension_numbers = #tpu.dot_dimension_numbers<[1], [0], [0], [1], [0, 0, 1, 1], [], []>} : vector<16x128xbf16>, vector<128x128xbf16>, vector<16x128xf32> -> vector<16x128xf32>
    %c0_15 = arith.constant 0 : index
    %c0_16 = arith.constant 0 : index
    %19 = vector.load %arg7[%c0_15, %c0_16] : memref<1x128xf32, #tpu.memory_space<vmem>>, vector<1x128xf32>
    %20 = vector.broadcast %19 : vector<1x128xf32> to vector<16x128xf32>
    %21 = arith.addf %18, %20 : vector<16x128xf32>
    %cst_17 = arith.constant 0.000000e+00 : f32
    %22 = vector.broadcast %cst_17 : f32 to vector<16x128xf32>
    %23 = arith.maximumf %21, %22 : vector<16x128xf32>
    %c0_18 = arith.constant 0 : index
    %c0_19 = arith.constant 0 : index
    %24 = vector.load %arg8[%c0_18, %c0_19] : memref<16x128xf32, #tpu.memory_space<vmem>>, vector<16x128xf32>
    tpu.vector_store %arg8[%c0_18, %c0_19], %23 {strides = array<i32>} : memref<16x128xf32, #tpu.memory_space<vmem>>, vector<16x128xf32>,
    return
  }
  func.func @transform_0(%arg0: i32) -> (i32, i32) {
    %c0_i32 = arith.constant 0 : i32
    %c0_i32_0 = arith.constant 0 : i32
    return %arg0, %c0_i32 : i32, i32
  }
  func.func @transform_1(%arg0: i32) -> (i32, i32) {
    %c0_i32 = arith.constant 0 : i32
    %c0_i32_0 = arith.constant 0 : i32
    %c0_i32_1 = arith.constant 0 : i32
    return %c0_i32, %c0_i32_0 : i32, i32
  }
  func.func @transform_2(%arg0: i32) -> (i32, i32) {
    %c0_i32 = arith.constant 0 : i32
    %c0_i32_0 = arith.constant 0 : i32
    %c0_i32_1 = arith.constant 0 : i32
    return %c0_i32, %c0_i32_0 : i32, i32
  }
  func.func @transform_3(%arg0: i32) -> (i32, i32) {
    %c0_i32 = arith.constant 0 : i32
    %c0_i32_0 = arith.constant 0 : i32
    %c0_i32_1 = arith.constant 0 : i32
    return %c0_i32, %c0_i32_0 : i32, i32
  }
  func.func @transform_4(%arg0: i32) -> (i32, i32) {
    %c0_i32 = arith.constant 0 : i32
    %c0_i32_0 = arith.constant 0 : i32
    %c0_i32_1 = arith.constant 0 : i32
    return %c0_i32, %c0_i32_0 : i32, i32
  }
  func.func @transform_5(%arg0: i32) -> (i32, i32) {
    %c0_i32 = arith.constant 0 : i32
    %c0_i32_0 = arith.constant 0 : i32
    %c0_i32_1 = arith.constant 0 : i32
    return %c0_i32, %c0_i32_0 : i32, i32
  }
  func.func @transform_6(%arg0: i32) -> (i32, i32) {
    %c0_i32 = arith.constant 0 : i32
    %c0_i32_0 = arith.constant 0 : i32
    %c0_i32_1 = arith.constant 0 : i32
    return %c0_i32, %c0_i32_0 : i32, i32
  }
  func.func @transform_7(%arg0: i32) -> (i32, i32) {
    %c0_i32 = arith.constant 0 : i32
    %c0_i32_0 = arith.constant 0 : i32
    return %arg0, %c0_i32 : i32, i32
  }
}

</mosaic_0001>

<llo_original>
// kernel: tpu_custom_call.1
$region0: #{tpu_custom_call.1}
  #allocation0 [shape = 'u32[]', space=smem, size = 0x4, offset = 0x4, fixed_abs, tag = 'smem constant byte address 0x4 - core index']
  #allocation1 [shape = 'u32[144,128]{1,0:T(1,128)}', space=vmem, size = 0x12000, scoped, tag = 'internal scratch']
  %s0 = inlined_call_operand.hbm [shape: bf16[16,128], index: 0, kind: input, shape index: {}]
  %s1 = inlined_call_operand.hbm [shape: bf16[128,256], index: 1, kind: input, shape index: {}]
  %s2 = inlined_call_operand.vmem [shape: f32[1,256], index: 2, kind: input, shape index: {}]
  %s3 = inlined_call_operand.hbm [shape: bf16[256,128], index: 3, kind: input, shape index: {}]
  %s4 = inlined_call_operand.vmem [shape: f32[1,128], index: 4, kind: input, shape index: {}]
  %s5 = inlined_call_operand.hbm [shape: bf16[128,128], index: 5, kind: input, shape index: {}]
  %s6 = inlined_call_operand.vmem [shape: f32[1,128], index: 6, kind: input, shape index: {}]
  %s7 = inlined_call_operand.hbm [shape: f32[16,128], index: 7, kind: output, shape index: {}]
  %s8 = sld [smem:[#allocation0]]
  $region54: #{tpu_custom_call.1} parent=0
    _
  %s10 = ssub.s32 1, %s8
  %s11 = scalar_select 0, %s10, %s8
  $region1: #{tpu_custom_call.1} parent=0
    #allocation2 [shape = 'u8[4096]{0}', space=vmem, size = 0x1000, scoped, tag = 'input window, operand 0, single buffered']
    #allocation3 [shape = 's32[1]{0}', space=sflag, size = 0x4, scoped, tag = 'scoped memory for tpu_custom_call.1']
    #allocation4 [shape = 's32[1]{0}', space=sflag, size = 0x4, scoped, tag = 'scoped memory for tpu_custom_call.1']
    #allocation5 [shape = 'u8[65536]{0}', space=vmem, size = 0x10000, scoped, tag = 'input window, operand 1, single buffered']
    #allocation6 [shape = 's32[1]{0}', space=sflag, size = 0x4, scoped, tag = 'scoped memory for tpu_custom_call.1']
    #allocation7 [shape = 'u8[65536]{0}', space=vmem, size = 0x10000, scoped, tag = 'input window, operand 3, single buffered']
    #allocation8 [shape = 'u8[32768]{0}', space=vmem, size = 0x8000, scoped, tag = 'input window, operand 5, single buffered']
    #allocation9 [shape = 's32[1]{0}', space=sflag, size = 0x4, scoped, tag = 'scoped memory for tpu_custom_call.1']
    #allocation10 [shape = 'u8[8192]{0}', space=vmem, size = 0x2000, scoped, tag = 'output window, operand 0, single buffered']
    %12 = vsyncpa [#allocation3], 0
    %13 = vsyncpa [#allocation6], 0
    %14 = vsyncpa [#allocation9], 0
    %15 = vsyncpa [#allocation4], 0
    // Predicated region
    $region2: #{tpu_custom_call.1} parent=1 // pred_check
      _
    $region3: #{tpu_custom_call.1} parent=1 // pred_check_branch
      %17 = sbr.rel (0) target = $region5
    $region4: #{tpu_custom_call.1} parent=1 // pred_region
      %s19 = ssub.s32 128, 128
      %20 = vsyncadd [#allocation3], %s19
      %s21 = sshll.u32 [#allocation2], 4
      %s22 = int_to_ptr.vmem [resolvable:$true] %s21
      %27 = dma.hbm_to_vmem [thread:$0]  %s0, 128, %s22, [#allocation3], 64, 64, 4
    $region5: #{tpu_custom_call.1} parent=1 // pred_fallthru
      _
    // Predicated region
    $region6: #{tpu_custom_call.1} parent=1 // pred_check
      _
    $region7: #{tpu_custom_call.1} parent=1 // pred_check_branch
      %29 = sbr.rel (0) target = $region9
    $region8: #{tpu_custom_call.1} parent=1 // pred_region
      %s31 = ssub.s32 2048, 2048
      %32 = vsyncadd [#allocation6], %s31
      %s33 = sshll.u32 [#allocation5], 4
      %s34 = int_to_ptr.vmem [resolvable:$true] %s33
      %39 = dma.hbm_to_vmem [thread:$0]  %s1, 2048, %s34, [#allocation6], 128, 128, 8
    $region9: #{tpu_custom_call.1} parent=1 // pred_fallthru
      _
    // Predicated region
    $region10: #{tpu_custom_call.1} parent=1 // pred_check
      _
    $region11: #{tpu_custom_call.1} parent=1 // pred_check_branch
      %41 = sbr.rel (0) target = $region13
    $region12: #{tpu_custom_call.1} parent=1 // pred_region
      _
    $region13: #{tpu_custom_call.1} parent=1 // pred_fallthru
      _
    // Predicated region
    $region14: #{tpu_custom_call.1} parent=1 // pred_check
      _
    $region15: #{tpu_custom_call.1} parent=1 // pred_check_branch
      %43 = sbr.rel (0) target = $region17
    $region16: #{tpu_custom_call.1} parent=1 // pred_region
      %s45 = ssub.s32 2048, 2048
      %46 = vsyncadd [#allocation6], %s45
      %s47 = sshll.u32 [#allocation7], 4
      %s48 = int_to_ptr.vmem [resolvable:$true] %s47
      %53 = dma.hbm_to_vmem [thread:$0]  %s3, 2048, %s48, [#allocation6], 64, 64, 4
    $region17: #{tpu_custom_call.1} parent=1 // pred_fallthru
      _
    // Predicated region
    $region18: #{tpu_custom_call.1} parent=1 // pred_check
      _
    $region19: #{tpu_custom_call.1} parent=1 // pred_check_branch
      %55 = sbr.rel (0) target = $region21
    $region20: #{tpu_custom_call.1} parent=1 // pred_region
      _
    $region21: #{tpu_custom_call.1} parent=1 // pred_fallthru
      _
    // Predicated region
    $region22: #{tpu_custom_call.1} parent=1 // pred_check
      _
    $region23: #{tpu_custom_call.1} parent=1 // pred_check_branch
      %57 = sbr.rel (0) target = $region25
    $region24: #{tpu_custom_call.1} parent=1 // pred_region
      %s59 = ssub.s32 1024, 1024
      %60 = vsyncadd [#allocation9], %s59
      %s61 = sshll.u32 [#allocation8], 4
      %s62 = int_to_ptr.vmem [resolvable:$true] %s61
      %67 = dma.hbm_to_vmem [thread:$0]  %s5, 1024, %s62, [#allocation9], 64, 64, 4
    $region25: #{tpu_custom_call.1} parent=1 // pred_fallthru
      _
    // Predicated region
    $region26: #{tpu_custom_call.1} parent=1 // pred_check
      _
    $region27: #{tpu_custom_call.1} parent=1 // pred_check_branch
      %69 = sbr.rel (0) target = $region29
    $region28: #{tpu_custom_call.1} parent=1 // pred_region
      _
    $region29: #{tpu_custom_call.1} parent=1 // pred_fallthru
      _
    // Predicated region
    $region30: #{tpu_custom_call.1} parent=1 // pred_check
      _
    $region31: #{tpu_custom_call.1} parent=1 // pred_check_branch
      %71 = sbr.rel (0) target = $region33
    $region32: #{tpu_custom_call.1} parent=1 // pred_region
      %72 = dma.done [#allocation3], 128
    $region33: #{tpu_custom_call.1} parent=1 // pred_fallthru
      _
    // Predicated region
    $region34: #{tpu_custom_call.1} parent=1 // pred_check
      _
    $region35: #{tpu_custom_call.1} parent=1 // pred_check_branch
      %74 = sbr.rel (0) target = $region37
    $region36: #{tpu_custom_call.1} parent=1 // pred_region
      %75 = dma.done [#allocation6], 2048
    $region37: #{tpu_custom_call.1} parent=1 // pred_fallthru
      _
    // Predicated region
    $region38: #{tpu_custom_call.1} parent=1 // pred_check
      _
    $region39: #{tpu_custom_call.1} parent=1 // pred_check_branch
      %77 = sbr.rel (0) target = $region41
    $region40: #{tpu_custom_call.1} parent=1 // pred_region
      %78 = dma.done [#allocation6], 2048
    $region41: #{tpu_custom_call.1} parent=1 // pred_fallthru
      _
    // Predicated region
    $region42: #{tpu_custom_call.1} parent=1 // pred_check
      _
    $region43: #{tpu_custom_call.1} parent=1 // pred_check_branch
      %80 = sbr.rel (0) target = $region45
    $region44: #{tpu_custom_call.1} parent=1 // pred_region
      %81 = dma.done [#allocation9], 1024
    $region45: #{tpu_custom_call.1} parent=1 // pred_fallthru
      _
    %v83 = vld [vmem:[#allocation2] sm:$0xf]
    %v84 = vld [vmem:[#allocation2 + $0x4] sm:$0xf]
    %v85 = vld [vmem:[#allocation5] sm:$0xff]
    %v86 = vld [vmem:[#allocation5 + $0x8] sm:$0xff]
    %v87 = vld [vmem:[#allocation5 + $0x10] sm:$0xff]
    %v88 = vld [vmem:[#allocation5 + $0x18] sm:$0xff]
    %v89 = vld [vmem:[#allocation5 + $0x20] sm:$0xff]
    %v90 = vld [vmem:[#allocation5 + $0x28] sm:$0xff]
    %v91 = vld [vmem:[#allocation5 + $0x30] sm:$0xff]
    %v92 = vld [vmem:[#allocation5 + $0x38] sm:$0xff]
    %v93 = vld [vmem:[#allocation5 + $0x40] sm:$0xff]
    %v94 = vld [vmem:[#allocation5 + $0x48] sm:$0xff]
    %v95 = vld [vmem:[#allocation5 + $0x50] sm:$0xff]
    %v96 = vld [vmem:[#allocation5 + $0x58] sm:$0xff]
    %v97 = vld [vmem:[#allocation5 + $0x60] sm:$0xff]
    %v98 = vld [vmem:[#allocation5 + $0x68] sm:$0xff]
    %v99 = vld [vmem:[#allocation5 + $0x70] sm:$0xff]
    %v100 = vld [vmem:[#allocation5 + $0x78] sm:$0xff]
    %v101 = vld [vmem:[%s2] sm:$0x3]
    %v103 = vlaneseq
    %v104 = vshrl.u32 %v103, 7
    %v105 = vsub.s32 0, %v104
    %v106 = vrot.slane %v101, %v105
    %v107 = vlaneseq
    %v108 = vshrl.u32 %v107, 7
    %v109 = vsub.s32 1, %v108
    %v110 = vrot.slane %v101, %v109
    %v115 = vunpack.c.l.b16 %v83
    %v116 = vunpack.c.l.b16 %v84
    %v117 = vpack.c.b16 %v116, %v115
    %v135 = vunpack.c.l.b16 %v85
    %v136 = vunpack.c.h.b16 %v85
    %v137 = vunpack.c.l.b16 %v86
    %v138 = vunpack.c.h.b16 %v86
    %v139 = vunpack.c.l.b16 %v87
    %v140 = vunpack.c.h.b16 %v87
    %v141 = vunpack.c.l.b16 %v88
    %v142 = vunpack.c.h.b16 %v88
    %v143 = vunpack.c.l.b16 %v89
    %v144 = vunpack.c.h.b16 %v89
    %v145 = vunpack.c.l.b16 %v90
    %v146 = vunpack.c.h.b16 %v90
    %v147 = vunpack.c.l.b16 %v91
    %v148 = vunpack.c.h.b16 %v91
    %v149 = vunpack.c.l.b16 %v92
    %v150 = vunpack.c.h.b16 %v92
    %v151 = vunpack.c.l.b16 %v93
    %v152 = vunpack.c.h.b16 %v93
    %v153 = vunpack.c.l.b16 %v94
    %v154 = vunpack.c.h.b16 %v94
    %v155 = vunpack.c.l.b16 %v95
    %v156 = vunpack.c.h.b16 %v95
    %v157 = vunpack.c.l.b16 %v96
    %v158 = vunpack.c.h.b16 %v96
    %v159 = vunpack.c.l.b16 %v97
    %v160 = vunpack.c.h.b16 %v97
    %v161 = vunpack.c.l.b16 %v98
    %v162 = vunpack.c.h.b16 %v98
    %v163 = vunpack.c.l.b16 %v99
    %v164 = vunpack.c.h.b16 %v99
    %v165 = vunpack.c.l.b16 %v100
    %v166 = vunpack.c.h.b16 %v100
    %v167 = vpack.c.b16 %v137, %v135
    %v168 = vpack.c.b16 %v138, %v136
    %v169 = vpack.c.b16 %v141, %v139
    %v170 = vpack.c.b16 %v142, %v140
    %v171 = vpack.c.b16 %v145, %v143
    %v172 = vpack.c.b16 %v146, %v144
    %v173 = vpack.c.b16 %v149, %v147
    %v174 = vpack.c.b16 %v150, %v148
    %v175 = vpack.c.b16 %v153, %v151
    %v176 = vpack.c.b16 %v154, %v152
    %v177 = vpack.c.b16 %v157, %v155
    %v178 = vpack.c.b16 %v158, %v156
    %v179 = vpack.c.b16 %v161, %v159
    %v180 = vpack.c.b16 %v162, %v160
    %v181 = vpack.c.b16 %v165, %v163
    %v182 = vpack.c.b16 %v166, %v164
    %199 = vmatprep.subr.bf16.mxu0 %v182
    %200 = vmatpush1.bf16.msra.mxu0 %v181
    %201 = vmatprep.subr.bf16.mxu0 %v180
    %202 = vmatpush1.bf16.msra.mxu0 %v179
    %203 = vmatprep.subr.bf16.mxu0 %v178
    %204 = vmatpush1.bf16.msra.mxu0 %v177
    %205 = vmatprep.subr.bf16.mxu0 %v176
    %206 = vmatpush1.bf16.msra.mxu0 %v175
    %207 = vmatprep.subr.bf16.mxu0 %v174
    %208 = vmatpush1.bf16.msra.mxu0 %v173
    %209 = vmatprep.subr.bf16.mxu0 %v172
    %210 = vmatpush1.bf16.msra.mxu0 %v171
    %211 = vmatprep.subr.bf16.mxu0 %v170
    %212 = vmatpush1.bf16.msra.mxu0 %v169
    %213 = vmatprep.subr.bf16.mxu0 %v168
    %214 = vmatpush1.bf16.msra.mxu0 %v167
    %215 = vmatprep.subr.bf16.mxu0 0
    %216 = vmatpush2.bf16.msra.mxu0 0
    %217 = vmatprep.subr.bf16.mxu0 0
    %218 = vmatpush2.bf16.msra.mxu0 0
    %219 = vmatprep.subr.bf16.mxu0 0
    %220 = vmatpush2.bf16.msra.mxu0 0
    %221 = vmatprep.subr.bf16.mxu0 0
    %222 = vmatpush2.bf16.msra.mxu0 0
    %223 = vmatprep.subr.bf16.mxu0 0
    %224 = vmatpush2.bf16.msra.mxu0 0
    %225 = vmatprep.subr.bf16.mxu0 0
    %226 = vmatpush2.bf16.msra.mxu0 0
    %227 = vmatprep.subr.bf16.mxu0 0
    %228 = vmatpush2.bf16.msra.mxu0 0
    %229 = vmatprep.subr.bf16.mxu0 0
    %230 = vmatpush2.bf16.msra.mxu0 0
    %231 = vmatprep.mubr.bf16.mxu0 0
    %232 = vmatmul.mubr.bf16.gmra.mxu0 %v117
    %v233 = vpop.f32.mrf.mxu0
    %v234 = vadd.f32 %v106, %v233
    %v235 = vpop.f32.mrf.mxu0
    %v236 = vadd.f32 %v110, %v235
    %v237 = vpop.f32.mrf.mxu0
    %v238 = vadd.f32 %v106, %v237
    %v239 = vpop.f32.mrf.mxu0
    %v240 = vadd.f32 %v110, %v239
    %241 = vdwg.mxu0
    %v242 = vmax.f32 %v234, 0.0
    %v243 = vmax.f32 %v236, 0.0
    %v244 = vmax.f32 %v238, 0.0
    %v245 = vmax.f32 %v240, 0.0
    %v246 = vpack.c.bf16 %v244, %v242
    %v247 = vpack.c.bf16 %v245, %v243
    %v248 = vld [vmem:[#allocation7] sm:$0xf]
    %v249 = vld [vmem:[#allocation7 + $0x4] sm:$0xf]
    %v250 = vld [vmem:[#allocation7 + $0x8] sm:$0xf]
    %v251 = vld [vmem:[#allocation7 + $0xc] sm:$0xf]
    %v252 = vld [vmem:[#allocation7 + $0x10] sm:$0xf]
    %v253 = vld [vmem:[#allocation7 + $0x14] sm:$0xf]
    %v254 = vld [vmem:[#allocation7 + $0x18] sm:$0xf]
    %v255 = vld [vmem:[#allocation7 + $0x1c] sm:$0xf]
    %v256 = vld [vmem:[#allocation7 + $0x20] sm:$0xf]
    %v257 = vld [vmem:[#allocation7 + $0x24] sm:$0xf]
    %v258 = vld [vmem:[#allocation7 + $0x28] sm:$0xf]
    %v259 = vld [vmem:[#allocation7 + $0x2c] sm:$0xf]
    %v260 = vld [vmem:[#allocation7 + $0x30] sm:$0xf]
    %v261 = vld [vmem:[#allocation7 + $0x34] sm:$0xf]
    %v262 = vld [vmem:[#allocation7 + $0x38] sm:$0xf]
    %v263 = vld [vmem:[#allocation7 + $0x3c] sm:$0xf]
    %v264 = vld [vmem:[#allocation7 + $0x40] sm:$0xf]
    %v265 = vld [vmem:[#allocation7 + $0x44] sm:$0xf]
    %v266 = vld [vmem:[#allocation7 + $0x48] sm:$0xf]
    %v267 = vld [vmem:[#allocation7 + $0x4c] sm:$0xf]
    %v268 = vld [vmem:[#allocation7 + $0x50] sm:$0xf]
    %v269 = vld [vmem:[#allocation7 + $0x54] sm:$0xf]
    %v270 = vld [vmem:[#allocation7 + $0x58] sm:$0xf]
    %v271 = vld [vmem:[#allocation7 + $0x5c] sm:$0xf]
    %v272 = vld [vmem:[#allocation7 + $0x60] sm:$0xf]
    %v273 = vld [vmem:[#allocation7 + $0x64] sm:$0xf]
    %v274 = vld [vmem:[#allocation7 + $0x68] sm:$0xf]
    %v275 = vld [vmem:[#allocation7 + $0x6c] sm:$0xf]
    %v276 = vld [vmem:[#allocation7 + $0x70] sm:$0xf]
    %v277 = vld [vmem:[#allocation7 + $0x74] sm:$0xf]
    %v278 = vld [vmem:[#allocation7 + $0x78] sm:$0xf]
    %v279 = vld [vmem:[#allocation7 + $0x7c] sm:$0xf]
    %v280 = vld [vmem:[%s4] sm:$0x1]
    %v282 = vlaneseq
    %v283 = vshrl.u32 %v282, 7
    %v284 = vsub.s32 0, %v283
    %v285 = vrot.slane %v280, %v284
    %v319 = vunpack.c.l.b16 %v248
    %v320 = vunpack.c.l.b16 %v249
    %v321 = vunpack.c.l.b16 %v250
    %v322 = vunpack.c.l.b16 %v251
    %v323 = vunpack.c.l.b16 %v252
    %v324 = vunpack.c.l.b16 %v253
    %v325 = vunpack.c.l.b16 %v254
    %v326 = vunpack.c.l.b16 %v255
    %v327 = vunpack.c.l.b16 %v256
    %v328 = vunpack.c.l.b16 %v257
    %v329 = vunpack.c.l.b16 %v258
    %v330 = vunpack.c.l.b16 %v259
    %v331 = vunpack.c.l.b16 %v260
    %v332 = vunpack.c.l.b16 %v261
    %v333 = vunpack.c.l.b16 %v262
    %v334 = vunpack.c.l.b16 %v263
    %v335 = vunpack.c.l.b16 %v264
    %v336 = vunpack.c.l.b16 %v265
    %v337 = vunpack.c.l.b16 %v266
    %v338 = vunpack.c.l.b16 %v267
    %v339 = vunpack.c.l.b16 %v268
    %v340 = vunpack.c.l.b16 %v269
    %v341 = vunpack.c.l.b16 %v270
    %v342 = vunpack.c.l.b16 %v271
    %v343 = vunpack.c.l.b16 %v272
    %v344 = vunpack.c.l.b16 %v273
    %v345 = vunpack.c.l.b16 %v274
    %v346 = vunpack.c.l.b16 %v275
    %v347 = vunpack.c.l.b16 %v276
    %v348 = vunpack.c.l.b16 %v277
    %v349 = vunpack.c.l.b16 %v278
    %v350 = vunpack.c.l.b16 %v279
    %v351 = vpack.c.b16 %v320, %v319
    %v352 = vpack.c.b16 %v322, %v321
    %v353 = vpack.c.b16 %v324, %v323
    %v354 = vpack.c.b16 %v326, %v325
    %v355 = vpack.c.b16 %v328, %v327
    %v356 = vpack.c.b16 %v330, %v329
    %v357 = vpack.c.b16 %v332, %v331
    %v358 = vpack.c.b16 %v334, %v333
    %v359 = vpack.c.b16 %v336, %v335
    %v360 = vpack.c.b16 %v338, %v337
    %v361 = vpack.c.b16 %v340, %v339
    %v362 = vpack.c.b16 %v342, %v341
    %v363 = vpack.c.b16 %v344, %v343
    %v364 = vpack.c.b16 %v346, %v345
    %v365 = vpack.c.b16 %v348, %v347
    %v366 = vpack.c.b16 %v350, %v349
    %383 = vmatprep.subr.bf16.mxu0 0
    %384 = vmatpush1.bf16.msra.mxu0 %v358
    %385 = vmatprep.subr.bf16.mxu0 0
    %386 = vmatpush1.bf16.msra.mxu0 %v357
    %387 = vmatprep.subr.bf16.mxu0 0
    %388 = vmatpush1.bf16.msra.mxu0 %v356
    %389 = vmatprep.subr.bf16.mxu0 0
    %390 = vmatpush1.bf16.msra.mxu0 %v355
    %391 = vmatprep.subr.bf16.mxu0 0
    %392 = vmatpush1.bf16.msra.mxu0 %v354
    %393 = vmatprep.subr.bf16.mxu0 0
    %394 = vmatpush1.bf16.msra.mxu0 %v353
    %395 = vmatprep.subr.bf16.mxu0 0
    %396 = vmatpush1.bf16.msra.mxu0 %v352
    %397 = vmatprep.subr.bf16.mxu0 0
    %398 = vmatpush1.bf16.msra.mxu0 %v351
    %399 = vmatprep.subr.bf16.mxu0 0
    %400 = vmatpush2.bf16.msra.mxu0 %v366
    %401 = vmatprep.subr.bf16.mxu0 0
    %402 = vmatpush2.bf16.msra.mxu0 %v365
    %403 = vmatprep.subr.bf16.mxu0 0
    %404 = vmatpush2.bf16.msra.mxu0 %v364
    %405 = vmatprep.subr.bf16.mxu0 0
    %406 = vmatpush2.bf16.msra.mxu0 %v363
    %407 = vmatprep.subr.bf16.mxu0 0
    %408 = vmatpush2.bf16.msra.mxu0 %v362
    %409 = vmatprep.subr.bf16.mxu0 0
    %410 = vmatpush2.bf16.msra.mxu0 %v361
    %411 = vmatprep.subr.bf16.mxu0 0
    %412 = vmatpush2.bf16.msra.mxu0 %v360
    %413 = vmatprep.subr.bf16.mxu0 0
    %414 = vmatpush2.bf16.msra.mxu0 %v359
    %415 = vmatprep.mubr.bf16.mxu0 %v247
    %416 = vmatmul.mubr.bf16.gmra.mxu0 %v246
    %v417 = vpop.f32.mrf.mxu0
    %v418 = vadd.f32 %v285, %v417
    %v419 = vpop.f32.mrf.mxu0
    %v420 = vpop.f32.mrf.mxu0
    %v421 = vadd.f32 %v285, %v420
    %v422 = vpop.f32.mrf.mxu0
    %423 = vdwg.mxu0
    %v424 = vmax.f32 %v418, 0.0
    %v425 = vmax.f32 %v421, 0.0
    %v426 = vpack.c.bf16 %v425, %v424
    %v427 = vld [vmem:[#allocation8] sm:$0xf]
    %v428 = vld [vmem:[#allocation8 + $0x4] sm:$0xf]
    %v429 = vld [vmem:[#allocation8 + $0x8] sm:$0xf]
    %v430 = vld [vmem:[#allocation8 + $0xc] sm:$0xf]
    %v431 = vld [vmem:[#allocation8 + $0x10] sm:$0xf]
    %v432 = vld [vmem:[#allocation8 + $0x14] sm:$0xf]
    %v433 = vld [vmem:[#allocation8 + $0x18] sm:$0xf]
    %v434 = vld [vmem:[#allocation8 + $0x1c] sm:$0xf]
    %v435 = vld [vmem:[#allocation8 + $0x20] sm:$0xf]
    %v436 = vld [vmem:[#allocation8 + $0x24] sm:$0xf]
    %v437 = vld [vmem:[#allocation8 + $0x28] sm:$0xf]
    %v438 = vld [vmem:[#allocation8 + $0x2c] sm:$0xf]
    %v439 = vld [vmem:[#allocation8 + $0x30] sm:$0xf]
    %v440 = vld [vmem:[#allocation8 + $0x34] sm:$0xf]
    %v441 = vld [vmem:[#allocation8 + $0x38] sm:$0xf]
    %v442 = vld [vmem:[#allocation8 + $0x3c] sm:$0xf]
    %v443 = vld [vmem:[%s6] sm:$0x1]
    %v445 = vlaneseq
    %v446 = vshrl.u32 %v445, 7
    %v447 = vsub.s32 0, %v446
    %v448 = vrot.slane %v443, %v447
    %v466 = vunpack.c.l.b16 %v427
    %v467 = vunpack.c.l.b16 %v428
    %v468 = vunpack.c.l.b16 %v429
    %v469 = vunpack.c.l.b16 %v430
    %v470 = vunpack.c.l.b16 %v431
    %v471 = vunpack.c.l.b16 %v432
    %v472 = vunpack.c.l.b16 %v433
    %v473 = vunpack.c.l.b16 %v434
    %v474 = vunpack.c.l.b16 %v435
    %v475 = vunpack.c.l.b16 %v436
    %v476 = vunpack.c.l.b16 %v437
    %v477 = vunpack.c.l.b16 %v438
    %v478 = vunpack.c.l.b16 %v439
    %v479 = vunpack.c.l.b16 %v440
    %v480 = vunpack.c.l.b16 %v441
    %v481 = vunpack.c.l.b16 %v442
    %v482 = vpack.c.b16 %v467, %v466
    %v483 = vpack.c.b16 %v469, %v468
    %v484 = vpack.c.b16 %v471, %v470
    %v485 = vpack.c.b16 %v473, %v472
    %v486 = vpack.c.b16 %v475, %v474
    %v487 = vpack.c.b16 %v477, %v476
    %v488 = vpack.c.b16 %v479, %v478
    %v489 = vpack.c.b16 %v481, %v480
    %498 = vmatprep.subr.bf16.mxu0 0
    %499 = vmatpush1.bf16.msra.mxu0 %v489
    %500 = vmatprep.subr.bf16.mxu0 0
    %501 = vmatpush1.bf16.msra.mxu0 %v488
    %502 = vmatprep.subr.bf16.mxu0 0
    %503 = vmatpush1.bf16.msra.mxu0 %v487
    %504 = vmatprep.subr.bf16.mxu0 0
    %505 = vmatpush1.bf16.msra.mxu0 %v486
    %506 = vmatprep.subr.bf16.mxu0 0
    %507 = vmatpush1.bf16.msra.mxu0 %v485
    %508 = vmatprep.subr.bf16.mxu0 0
    %509 = vmatpush1.bf16.msra.mxu0 %v484
    %510 = vmatprep.subr.bf16.mxu0 0
    %511 = vmatpush1.bf16.msra.mxu0 %v483
    %512 = vmatprep.subr.bf16.mxu0 0
    %513 = vmatpush1.bf16.msra.mxu0 %v482
    %514 = vmatprep.subr.bf16.mxu0 0
    %515 = vmatpush2.bf16.msra.mxu0 0
    %516 = vmatprep.subr.bf16.mxu0 0
    %517 = vmatpush2.bf16.msra.mxu0 0
    %518 = vmatprep.subr.bf16.mxu0 0
    %519 = vmatpush2.bf16.msra.mxu0 0
    %520 = vmatprep.subr.bf16.mxu0 0
    %521 = vmatpush2.bf16.msra.mxu0 0
    %522 = vmatprep.subr.bf16.mxu0 0
    %523 = vmatpush2.bf16.msra.mxu0 0
    %524 = vmatprep.subr.bf16.mxu0 0
    %525 = vmatpush2.bf16.msra.mxu0 0
    %526 = vmatprep.subr.bf16.mxu0 0
    %527 = vmatpush2.bf16.msra.mxu0 0
    %528 = vmatprep.subr.bf16.mxu0 0
    %529 = vmatpush2.bf16.msra.mxu0 0
    %530 = vmatprep.mubr.bf16.mxu0 0
    %531 = vmatmul.mubr.bf16.gmra.mxu0 %v426
    %v532 = vpop.f32.mrf.mxu0
    %v533 = vadd.f32 %v448, %v532
    %v534 = vpop.f32.mrf.mxu0
    %v535 = vpop.f32.mrf.mxu0
    %v536 = vadd.f32 %v448, %v535
    %v537 = vpop.f32.mrf.mxu0
    %538 = vdwg.mxu0
    %v539 = vmax.f32 %v533, 0.0
    %v540 = vmax.f32 %v536, 0.0
    %541 = vst [vmem:[#allocation10] sm:$0xff] %v539
    %542 = vst [vmem:[#allocation10 + $0x8] sm:$0xff] %v540
    // Predicated region
    $region46: #{tpu_custom_call.1} parent=1 // pred_check
      _
    $region47: #{tpu_custom_call.1} parent=1 // pred_check_branch
      %544 = sbr.rel (0) target = $region49
    $region48: #{tpu_custom_call.1} parent=1 // pred_region
      %s546 = ssub.s32 256, 256
      %547 = vsyncadd [#allocation4], %s546
      %s548 = sshll.u32 [#allocation10], 4
      %s549 = int_to_ptr.vmem [resolvable:$true] %s548
      %554 = dma.vmem_to_hbm [thread:$0]  %s549, 256, %s7, [#allocation4], 128, 128, 8
    $region49: #{tpu_custom_call.1} parent=1 // pred_fallthru
      _
    // Predicated region
    $region50: #{tpu_custom_call.1} parent=1 // pred_check
      _
    $region51: #{tpu_custom_call.1} parent=1 // pred_check_branch
      %556 = sbr.rel (0) target = $region53
    $region52: #{tpu_custom_call.1} parent=1 // pred_region
      %557 = dma.done [#allocation4], 256
    $region53: #{tpu_custom_call.1} parent=1 // pred_fallthru
      _
    %558 = vsyncpa [#allocation3], 1
    %559 = vsyncpa [#allocation6], 1
    %560 = vsyncpa [#allocation9], 1
    %561 = vsyncpa [#allocation4], 1

</llo_original>
